<compile_context>
chip_gen: v7x
topology: tpu7x:2x2x1
jax: 0.10.0
libtpu: 0.0.40
codegen_flags: <defaults>
</compile_context>

<pallas_src>
import functools

import jax
import jax.numpy as jnp
from jax.experimental import pallas as pl
from jax.experimental.pallas import tpu as pltpu

LANE = 128


def _pad_up(n: int) -> int:
    return ((n + LANE - 1) // LANE) * LANE


# ----------------------------- fused layer-streamed kernel -----------------------------

def _mlp_layer_kernel(x_ref, w_ref, g_ref, s_ref, o_ref, h_ref, *, inv_n, eps):
    """One grid step == one layer.

    Steps 0..L-2 : h <- ReLU(BatchNorm1d(h @ W_l))      (training-mode batch stats)
    Step  L-1    : out <- h @ W_final + b_final
    `h_ref` (VMEM scratch) persists across grid steps; W_l streams with double-buffered DMA.
    """
    l = pl.program_id(0)
    last = pl.num_programs(0) - 1

    @pl.when(l == 0)
    def _():
        h_ref[...] = x_ref[...].astype(h_ref.dtype)

    # MXU matmul in compute dtype (bf16 by default), f32 accumulation.
    y = jnp.dot(h_ref[...], w_ref[0], preferred_element_type=jnp.float32)

    @pl.when(l < last)
    def _():
        # BatchNorm1d training-mode stats (biased variance) over the true batch axis.
        # (XLU reduce + EUP rsqrt: off the MXU/VALU critical slots, left as-is per review.)
        mean = jnp.sum(y, axis=0, keepdims=True) * inv_n
        diff = y - mean
        var = jnp.sum(diff * diff, axis=0, keepdims=True) * inv_n
        scale = g_ref[0] * jax.lax.rsqrt(var + eps)       # gamma folded into the rsqrt
        z = diff * scale + s_ref[0]
        h_ref[...] = jnp.maximum(z, 0.0).astype(h_ref.dtype)   # ReLU

    @pl.when(l == last)
    def _():
        o_ref[...] = (y + s_ref[0]).astype(o_ref.dtype)


# ----------------------------- one-time parameter preparation -----------------------------

def prepare_params(params, compute_dtype=jnp.bfloat16):
    """Pad every layer to a common 128-lane width, stack along a layer axis, cast weights
    to the MXU compute dtype.  Done ONCE, not per forward call."""
    dims = []
    for _kind, layer in params:
        w = layer[0]
        dims += [w.shape[0], w.shape[1]]
    fpad = max(_pad_up(d) for d in dims)
    # TODO(synk): layers with wildly different widths waste pad space with a single Fpad;
    # a per-layer-width grid would need ragged BlockSpecs.

    w_stack, g_stack, s_stack = [], [], []
    layer_dims = []
    for kind, layer in params:
        if kind == "block":
            w, _b, gamma, beta = layer          # Linear bias dropped: cancels under BN mean
            g = jnp.reshape(gamma, (-1,)).astype(jnp.float32)
            s = jnp.reshape(beta, (-1,)).astype(jnp.float32)
        else:
            w, b = layer
            g = jnp.ones((w.shape[1],), jnp.float32)         # unused for the final layer
            s = jnp.reshape(b, (-1,)).astype(jnp.float32)
        fi, fo = w.shape
        layer_dims.append((fi, fo))
        wp = jnp.pad(w.astype(jnp.float32), ((0, fpad - fi), (0, fpad - fo)))
        w_stack.append(wp.astype(compute_dtype))
        g_stack.append(jnp.pad(g, (0, fpad - fo)).reshape(1, fpad))
        s_stack.append(jnp.pad(s, (0, fpad - fo)).reshape(1, fpad))

    return dict(
        w=jnp.stack(w_stack),            # (L, Fpad, Fpad)  compute_dtype
        g=jnp.stack(g_stack),            # (L, 1, Fpad)     f32 (gamma; ones for final)
        s=jnp.stack(s_stack),            # (L, 1, Fpad)     f32 (beta; final bias for last)
        fpad=fpad,
        n_layers=len(params),
        in_features=params[0][1][0].shape[0],
        out_features=params[-1][1][0].shape[1],
        layer_dims=layer_dims,
        compute_dtype=compute_dtype,
    )


# ----------------------------- forward wrapper -----------------------------

def mlp_forward(prepared, x, eps=1e-5):
    assert x.ndim == 2  # TODO(synk): should_flatten=True would just be x.reshape(B, -1) here
    batch, in_f = x.shape
    assert in_f == prepared["in_features"]
    fpad = prepared["fpad"]
    L = prepared["n_layers"]
    cdt = prepared["compute_dtype"]

    xp = jnp.pad(x, ((0, 0), (0, fpad - in_f)))   # only x is padded per call

    # Advisory cost estimate (logical flops) so XLA schedules around the call.
    flops = 2 * batch * sum(fi * fo for fi, fo in prepared["layer_dims"])
    transcendentals = (L - 1) * fpad
    itemsize = jnp.dtype(cdt).itemsize
    bytes_accessed = int(
        prepared["w"].size * itemsize + prepared["g"].size * 4 + prepared["s"].size * 4
        + xp.size * xp.dtype.itemsize + batch * fpad * xp.dtype.itemsize)

    # VMEM budget: double-buffered per-layer weight tile + gamma/beta, x/out blocks,
    # persistent activation scratch.  Cap below physical VMEM (64 MiB on v7x).
    w_tile = fpad * fpad * itemsize
    vec_tile = fpad * 4
    io_bytes = batch * fpad * xp.dtype.itemsize
    vmem_needed = 2 * (w_tile + 2 * vec_tile) + 2 * (2 * io_bytes) + batch * fpad * itemsize + (1 << 20)
    try:
        vmem_cap = pltpu.get_tpu_info().vmem_capacity_bytes
    except Exception:
        vmem_cap = 64 * 1024 * 1024          # conservative: v7x per-core VMEM
    vmem_limit = int(min(max(2 * vmem_needed, 8 << 20), vmem_cap - (4 << 20)))

    # TODO(synk): at large batch, add a parallel batch-tile grid axis (two-pass BN stats)
    # to use both v7x TensorCores; at batch=8 the kernel is DMA/latency bound anyway.
    out = pl.pallas_call(
        functools.partial(_mlp_layer_kernel, inv_n=1.0 / batch, eps=eps),
        out_shape=jax.ShapeDtypeStruct((batch, fpad), x.dtype),
        grid=(L,),
        in_specs=[
            pl.BlockSpec((batch, fpad), lambda l: (0, 0)),        # x: resident, loaded once
            pl.BlockSpec((1, fpad, fpad), lambda l: (l, 0, 0)),   # W_l: streamed, double-buffered
            pl.BlockSpec((1, 1, fpad), lambda l: (l, 0, 0)),      # gamma_l
            pl.BlockSpec((1, 1, fpad), lambda l: (l, 0, 0)),      # beta_l / final bias
        ],
        out_specs=pl.BlockSpec((batch, fpad), lambda l: (0, 0)),  # written at last step only
        scratch_shapes=[pltpu.VMEM((batch, fpad), cdt)],          # persistent activation
        compiler_params=pltpu.CompilerParams(
            dimension_semantics=("arbitrary",),                   # layers are sequential
            vmem_limit_bytes=vmem_limit,
        ),
        cost_estimate=pl.CostEstimate(
            flops=flops, transcendentals=transcendentals, bytes_accessed=bytes_accessed),
    )(xp, prepared["w"], prepared["g"], prepared["s"])
    return out[:, :prepared["out_features"]]


# ----------------------------- parameter construction (torch-like) -----------------------------

def init_mlp_params(key, input_count, hidden_counts, output_count):
    """Mirrors MLP(input_count, hidden_counts, output_count, channel_count=None,
    should_normalize=True, should_flatten=False).  gamma/beta/bias stored 1-D (torch layout)."""
    params = []
    counts = [input_count] + hidden_counts
    for fan_in, fan_out in zip(counts[:-1], counts[1:]):
        key, kw, kb = jax.random.split(key, 3)
        bound = 1.0 / (fan_in ** 0.5)
        w = jax.random.uniform(kw, (fan_in, fan_out), jnp.float32, -bound, bound)
        b = jax.random.uniform(kb, (fan_out,), jnp.float32, -bound, bound)
        gamma = jnp.ones((fan_out,), jnp.float32)
        beta = jnp.zeros((fan_out,), jnp.float32)
        params.append(("block", (w, b, gamma, beta)))
    fan_in = hidden_counts[-1]
    key, kw, kb = jax.random.split(key, 3)
    bound = 1.0 / (fan_in ** 0.5)
    w = jax.random.uniform(kw, (fan_in, output_count), jnp.float32, -bound, bound)
    b = jax.random.uniform(kb, (output_count,), jnp.float32, -bound, bound)
    params.append(("final", (w, b)))
    return params


def ref_forward(params, x, eps=1e-5):
    """Pure-JAX reference of the exact PyTorch math (includes the pre-BN Linear bias,
    which cancels under mean subtraction — so it must match the bias-free kernel)."""
    h = x
    for kind, layer in params:
        if kind == "block":
            w, b, gamma, beta = layer
            y = h @ w + b
            mean = jnp.mean(y, axis=0, keepdims=True)
            var = jnp.mean((y - mean) ** 2, axis=0, keepdims=True)
            h = jnp.maximum((y - mean) / jnp.sqrt(var + eps) * gamma + beta, 0.0)
        else:
            w, b = layer
            h = h @ w + b
    return h


# ----------------------------- demo -----------------------------

if __name__ == "__main__":
    key = jax.random.PRNGKey(0)
    kx, kp = jax.random.split(key)

    batch = 8
    input_count = 16
    hidden_counts = [32, 32]
    output_count = 8

    x = jax.random.normal(kx, (batch, input_count), jnp.float32)
    params = init_mlp_params(kp, input_count, hidden_counts, output_count)
    ref = ref_forward(params, x)

    # f32 compute path: tight check against the exact PyTorch-semantics reference.
    prep_f32 = prepare_params(params, compute_dtype=jnp.float32)
    out_f32 = mlp_forward(prep_f32, x)
    jax.block_until_ready(out_f32)
    assert out_f32.shape == (batch, output_count)
    assert jnp.allclose(out_f32, ref, atol=1e-4, rtol=1e-4)

    # bf16 compute path (default, per perf review): bf16 weights/activations into the MXU,
    # f32 accumulation + BN stats — loose tolerance vs the f32 reference.
    prep_bf16 = prepare_params(params)
    out_bf16 = mlp_forward(prep_bf16, x)
    jax.block_until_ready(out_bf16)
    assert out_bf16.shape == (batch, output_count)
    assert jnp.allclose(out_bf16, ref, atol=1e-1, rtol=1e-1)

    print("KERNEL_OK")
</pallas_src>

<mosaic_0001>
module attributes {stable_mosaic.version = 11 : i64} {
  func.func @_mlp_layer_kernel(%arg0: i32, %arg1: memref<8x128xf32, #tpu.memory_space<vmem>>, %arg2: memref<1x128x128xf32, #tpu.memory_space<vmem>>, %arg3: memref<1x1x128xf32, #tpu.memory_space<vmem>>, %arg4: memref<1x1x128xf32, #tpu.memory_space<vmem>>, %arg5: memref<8x128xf32, #tpu.memory_space<vmem>>, %arg6: memref<8x128xf32, #tpu.memory_space<vmem>>) attributes {dimension_semantics = [#tpu.dimension_semantics<arbitrary>], iteration_bounds = array<i64: 3>, scalar_prefetch = 0 : i64, scratch_operands = 1 : i64, tpu.core_type = #tpu.core_type<tc>, window_params = [{pipeline_mode = #tpu.pipeline_mode<synchronous>, transform_indices = @transform_0, window_bounds = array<i64: 8, 128>}, {transform_indices = @transform_1, window_bounds = array<i64: 1, 128, 128>}, {transform_indices = @transform_2, window_bounds = array<i64: 1, 1, 128>}, {transform_indices = @transform_3, window_bounds = array<i64: 1, 1, 128>}, {pipeline_mode = #tpu.pipeline_mode<synchronous>, transform_indices = @transform_4, window_bounds = array<i64: 8, 128>}]} {
    %c0_i32 = arith.constant 0 : i32
    %0 = arith.cmpi eq, %arg0, %c0_i32 : i32
    %1 = arith.extui %0 : i1 to i32
    %c0_i32_0 = arith.constant 0 : i32
    %2 = arith.cmpi ne, %1, %c0_i32_0 : i32
    scf.if %2 {
      %c0_8 = arith.constant 0 : index
      %c0_9 = arith.constant 0 : index
      %13 = vector.load %arg1[%c0_8, %c0_9] : memref<8x128xf32, #tpu.memory_space<vmem>>, vector<8x128xf32>
      %c0_10 = arith.constant 0 : index
      %c0_11 = arith.constant 0 : index
      %14 = vector.load %arg6[%c0_10, %c0_11] : memref<8x128xf32, #tpu.memory_space<vmem>>, vector<8x128xf32>
      tpu.vector_store %arg6[%c0_10, %c0_11], %13 {strides = array<i32>} : memref<8x128xf32, #tpu.memory_space<vmem>>, vector<8x128xf32>,
    } else {
    }
    %c0 = arith.constant 0 : index
    %c0_1 = arith.constant 0 : index
    %3 = vector.load %arg6[%c0, %c0_1] : memref<8x128xf32, #tpu.memory_space<vmem>>, vector<8x128xf32>
    %c0_2 = arith.constant 0 : index
    %c0_3 = arith.constant 0 : index
    %c0_4 = arith.constant 0 : index
    %4 = vector.load %arg2[%c0_2, %c0_3, %c0_4] : memref<1x128x128xf32, #tpu.memory_space<vmem>>, vector<1x128x128xf32>
    %5 = vector.shape_cast %4 : vector<1x128x128xf32> to vector<128x128xf32>
    %cst = arith.constant dense<0.000000e+00> : vector<8x128xf32>
    %6 = tpu.matmul %3, %5, %cst {dimension_numbers = #tpu.dot_dimension_numbers<[1], [0], [0], [1], [0, 0, 1, 1], [], []>} : vector<8x128xf32>, vector<128x128xf32>, vector<8x128xf32> -> vector<8x128xf32>
    %c2_i32 = arith.constant 2 : i32
    %7 = arith.cmpi slt, %arg0, %c2_i32 : i32
    %8 = arith.extui %7 : i1 to i32
    %c0_i32_5 = arith.constant 0 : i32
    %9 = arith.cmpi ne, %8, %c0_i32_5 : i32
    scf.if %9 {
      %cst_8 = arith.constant dense<0.000000e+00> : vector<128xf32>
      %13 = vector.multi_reduction <add>, %6, %cst_8 [0] : vector<8x128xf32> to vector<128xf32>
      %14 = vector.shape_cast %13 : vector<128xf32> to vector<1x128xf32>
      %cst_9 = arith.constant 1.250000e-01 : f32
      %15 = vector.broadcast %cst_9 : f32 to vector<1x128xf32>
      %16 = arith.mulf %14, %15 : vector<1x128xf32>
      %17 = vector.broadcast %16 : vector<1x128xf32> to vector<8x128xf32>
      %18 = arith.subf %6, %17 : vector<8x128xf32>
      %19 = arith.mulf %18, %18 : vector<8x128xf32>
      %cst_10 = arith.constant dense<0.000000e+00> : vector<128xf32>
      %20 = vector.multi_reduction <add>, %19, %cst_10 [0] : vector<8x128xf32> to vector<128xf32>
      %21 = vector.shape_cast %20 : vector<128xf32> to vector<1x128xf32>
      %cst_11 = arith.constant 1.250000e-01 : f32
      %22 = vector.broadcast %cst_11 : f32 to vector<1x128xf32>
      %23 = arith.mulf %21, %22 : vector<1x128xf32>
      %c0_12 = arith.constant 0 : index
      %c0_13 = arith.constant 0 : index
      %c0_14 = arith.constant 0 : index
      %24 = vector.load %arg3[%c0_12, %c0_13, %c0_14] : memref<1x1x128xf32, #tpu.memory_space<vmem>>, vector<1x1x128xf32>
      %25 = vector.shape_cast %24 : vector<1x1x128xf32> to vector<1x128xf32>
      %cst_15 = arith.constant 9.99999974E-6 : f32
      %26 = vector.broadcast %cst_15 : f32 to vector<1x128xf32>
      %27 = arith.addf %23, %26 : vector<1x128xf32>
      %28 = math.rsqrt %27 : vector<1x128xf32>
      %29 = arith.mulf %25, %28 : vector<1x128xf32>
      %30 = vector.broadcast %29 : vector<1x128xf32> to vector<8x128xf32>
      %31 = arith.mulf %18, %30 : vector<8x128xf32>
      %c0_16 = arith.constant 0 : index
      %c0_17 = arith.constant 0 : index
      %c0_18 = arith.constant 0 : index
      %32 = vector.load %arg4[%c0_16, %c0_17, %c0_18] : memref<1x1x128xf32, #tpu.memory_space<vmem>>, vector<1x1x128xf32>
      %33 = vector.shape_cast %32 : vector<1x1x128xf32> to vector<1x128xf32>
      %34 = vector.broadcast %33 : vector<1x128xf32> to vector<8x128xf32>
      %35 = arith.addf %31, %34 : vector<8x128xf32>
      %cst_19 = arith.constant 0.000000e+00 : f32
      %36 = vector.broadcast %cst_19 : f32 to vector<8x128xf32>
      %37 = arith.maximumf %35, %36 : vector<8x128xf32>
      %c0_20 = arith.constant 0 : index
      %c0_21 = arith.constant 0 : index
      %38 = vector.load %arg6[%c0_20, %c0_21] : memref<8x128xf32, #tpu.memory_space<vmem>>, vector<8x128xf32>
      tpu.vector_store %arg6[%c0_20, %c0_21], %37 {strides = array<i32>} : memref<8x128xf32, #tpu.memory_space<vmem>>, vector<8x128xf32>,
    } else {
    }
    %c2_i32_6 = arith.constant 2 : i32
    %10 = arith.cmpi eq, %arg0, %c2_i32_6 : i32
    %11 = arith.extui %10 : i1 to i32
    %c0_i32_7 = arith.constant 0 : i32
    %12 = arith.cmpi ne, %11, %c0_i32_7 : i32
    scf.if %12 {
      %c0_8 = arith.constant 0 : index
      %c0_9 = arith.constant 0 : index
      %c0_10 = arith.constant 0 : index
      %13 = vector.load %arg4[%c0_8, %c0_9, %c0_10] : memref<1x1x128xf32, #tpu.memory_space<vmem>>, vector<1x1x128xf32>
      %14 = vector.shape_cast %13 : vector<1x1x128xf32> to vector<1x128xf32>
      %15 = vector.broadcast %14 : vector<1x128xf32> to vector<8x128xf32>
      %16 = arith.addf %6, %15 : vector<8x128xf32>
      %c0_11 = arith.constant 0 : index
      %c0_12 = arith.constant 0 : index
      %17 = vector.load %arg5[%c0_11, %c0_12] : memref<8x128xf32, #tpu.memory_space<vmem>>, vector<8x128xf32>
      tpu.vector_store %arg5[%c0_11, %c0_12], %16 {strides = array<i32>} : memref<8x128xf32, #tpu.memory_space<vmem>>, vector<8x128xf32>,
    } else {
    }
    return
  }
  func.func @transform_0(%arg0: i32) -> (i32, i32) {
    %c0_i32 = arith.constant 0 : i32
    %c0_i32_0 = arith.constant 0 : i32
    %c0_i32_1 = arith.constant 0 : i32
    return %c0_i32, %c0_i32_0 : i32, i32
  }
  func.func @transform_1(%arg0: i32) -> (i32, i32, i32) {
    %c0_i32 = arith.constant 0 : i32
    %c0_i32_0 = arith.constant 0 : i32
    %c0_i32_1 = arith.constant 0 : i32
    return %arg0, %c0_i32, %c0_i32_0 : i32, i32, i32
  }
  func.func @transform_2(%arg0: i32) -> (i32, i32, i32) {
    %c0_i32 = arith.constant 0 : i32
    %c0_i32_0 = arith.constant 0 : i32
    %c0_i32_1 = arith.constant 0 : i32
    return %arg0, %c0_i32, %c0_i32_0 : i32, i32, i32
  }
  func.func @transform_3(%arg0: i32) -> (i32, i32, i32) {
    %c0_i32 = arith.constant 0 : i32
    %c0_i32_0 = arith.constant 0 : i32
    %c0_i32_1 = arith.constant 0 : i32
    return %arg0, %c0_i32, %c0_i32_0 : i32, i32, i32
  }
  func.func @transform_4(%arg0: i32) -> (i32, i32) {
    %c0_i32 = arith.constant 0 : i32
    %c0_i32_0 = arith.constant 0 : i32
    %c0_i32_1 = arith.constant 0 : i32
    return %c0_i32, %c0_i32_0 : i32, i32
  }
}

</mosaic_0001>

<llo_original>
// kernel: tpu_custom_call.1
$region0: #{tpu_custom_call.1}
  #allocation0 [shape = 'u32[]', space=smem, size = 0x4, offset = 0x4, fixed_abs, tag = 'smem constant byte address 0x4 - core index']
  #allocation1 [shape = 'u32[144,128]{1,0:T(1,128)}', space=vmem, size = 0x12000, scoped, tag = 'internal scratch']
  #allocation2 [shape = 'f32[8,128]{1,0:T(8,128)}', space=vmem, size = 0x1000, scoped, tag = 'scratch operand']
  %s0 = inlined_call_operand.hbm [shape: f32[8,128], index: 0, kind: input, shape index: {}]
  %s1 = inlined_call_operand.hbm [shape: f32[3,128,128], index: 1, kind: input, shape index: {}]
  %s2 = inlined_call_operand.vmem [shape: f32[3,1,128], index: 2, kind: input, shape index: {}]
  %s3 = inlined_call_operand.vmem [shape: f32[3,1,128], index: 3, kind: input, shape index: {}]
  %s4 = inlined_call_operand.hbm [shape: f32[8,128], index: 4, kind: output, shape index: {}]
  %s5 = sld [smem:[#allocation0]]
  $region69: #{tpu_custom_call.1} parent=0
    _
  %s7 = ssub.s32 1, %s5
  %s8 = scalar_select 0, %s7, %s5
  $region1: #{tpu_custom_call.1} parent=0
    #allocation3 [shape = 'u8[4096]{0}', space=vmem, size = 0x1000, scoped, tag = 'input window, operand 0, single buffered']
    #allocation4 [shape = 's32[2]{0}', space=sflag, size = 0x8, scoped, tag = 'scoped memory for tpu_custom_call.1']
    #allocation5 [shape = 's32[2]{0}', space=sflag, size = 0x8, scoped, tag = 'scoped memory for tpu_custom_call.1']
    #allocation6 [shape = 'u8[131072]{0}', space=vmem, size = 0x20000, scoped, tag = 'input window, operand 1']
    #allocation7 [shape = 's32[2]{0}', space=sflag, size = 0x8, scoped, tag = 'scoped memory for tpu_custom_call.1']
    #allocation8 [shape = 'u8[4096]{0}', space=vmem, size = 0x1000, scoped, tag = 'output window, operand 0, single buffered']
    %9 = vsyncpa [#allocation4], 0
    %10 = vsyncpa [#allocation7], 0
    %s11 = scalar_lea.sflag [#allocation7], 1
    %12 = vsyncpa %s11, 0
    %13 = vsyncpa [#allocation5], 0
    loop: start=0, step=1, limit=5
    $region2: #{tpu_custom_call.1} parent=1 // loop_pre_header
      _
    $region3: #{tpu_custom_call.1} parent=1 // loop_header
      %s15 = sphi 0, %s19
      %p16 = scmp.ge.s32.totalorder %s15, 5
      %s23 = sphi 0, %s23
      %s25 = sphi 0, %s23
      %s26 = sphi 0, %s25
      %s40 = sphi 0, %s26
      %s46 = sphi 0, %s48
      %s49 = sphi 0, %s46
      %s50 = sphi 0, %s49
      %s66 = sphi 0, %s50
      %s72 = sphi 0, %s74
      %s75 = sphi 0, %s72
      %s76 = sphi 0, %s75
      %s92 = sphi 0, %s76
      %s98 = sphi 0, %s100
      %s101 = sphi 0, %s98
      %s102 = sphi 0, %s101
      %s118 = sphi 0, %s102
      %s122 = sphi 0, %s122
      %s124 = sphi 0, %s122
      %s125 = sphi 0, %s124
      %s139 = sphi 0, %s125
    $region4: #{tpu_custom_call.1} parent=1 // loop_header_branch
      %18 = sbr.rel (%p16) target = $region8
    $region5: #{tpu_custom_call.1} parent=1 // loop_body
      %s20 = ssub.s32 %s15, 1
      %s21 = ssub.s32 %s15, 2
      %s22 = sadd.s32 %s15, 1
      %s24 = sadd.s32 %s23, 1
      %p27 = scmp.eq.s32.totalorder %s15, 2
      %p28 = scmp.ne.s32.totalorder %s23, %s25
      %p29 = scmp.eq.s32.totalorder %s15, 0
      %p30 = por %p28, %p29
      %p31 = scmp.ne.s32.totalorder %s23, %s25
      %p32 = scmp.eq.s32.totalorder %s20, 2
      %p33 = por %p31, %p32
      %p34 = scmp.ne.s32.totalorder %s25, %s26
      %p35 = scmp.eq.s32.totalorder %s20, 0
      %p36 = por %p34, %p35
      %p37 = scmp.ne.s32.totalorder %s25, %s26
      %p38 = scmp.eq.s32.totalorder %s21, 2
      %p39 = por %p37, %p38
      %p41 = scmp.ne.s32.totalorder %s26, %s40
      %p42 = scmp.eq.s32.totalorder %s21, 0
      %p43 = por %p41, %p42
      %s44 = ssub.s32 %s15, %s22
      %p45 = scmp.eq.s32.totalorder %s44, 0
      %s47 = sadd.s32 %s46, 1
      %s48 = scalar_select %p45, %s46, %s47
      %p51 = pneg %p45
      %p52 = scmp.eq.s32.totalorder %s15, 2
      %p53 = por %p51, %p52
      %p54 = scmp.ne.s32.totalorder %s46, %s49
      %p55 = scmp.eq.s32.totalorder %s15, 0
      %p56 = por %p54, %p55
      %p57 = scmp.ne.s32.totalorder %s46, %s49
      %p58 = scmp.eq.s32.totalorder %s20, 2
      %p59 = por %p57, %p58
      %p60 = scmp.ne.s32.totalorder %s49, %s50
      %p61 = scmp.eq.s32.totalorder %s20, 0
      %p62 = por %p60, %p61
      %p63 = scmp.ne.s32.totalorder %s49, %s50
      %p64 = scmp.eq.s32.totalorder %s21, 2
      %p65 = por %p63, %p64
      %p67 = scmp.ne.s32.totalorder %s50, %s66
      %p68 = scmp.eq.s32.totalorder %s21, 0
      %p69 = por %p67, %p68
      %s70 = ssub.s32 %s15, %s22
      %p71 = scmp.eq.s32.totalorder %s70, 0
      %s73 = sadd.s32 %s72, 1
      %s74 = scalar_select %p71, %s72, %s73
      %p77 = pneg %p71
      %p78 = scmp.eq.s32.totalorder %s15, 2
      %p79 = por %p77, %p78
      %p80 = scmp.ne.s32.totalorder %s72, %s75
      %p81 = scmp.eq.s32.totalorder %s15, 0
      %p82 = por %p80, %p81
      %p83 = scmp.ne.s32.totalorder %s72, %s75
      %p84 = scmp.eq.s32.totalorder %s20, 2
      %p85 = por %p83, %p84
      %p86 = scmp.ne.s32.totalorder %s75, %s76
      %p87 = scmp.eq.s32.totalorder %s20, 0
      %p88 = por %p86, %p87
      %p89 = scmp.ne.s32.totalorder %s75, %s76
      %p90 = scmp.eq.s32.totalorder %s21, 2
      %p91 = por %p89, %p90
      %p93 = scmp.ne.s32.totalorder %s76, %s92
      %p94 = scmp.eq.s32.totalorder %s21, 0
      %p95 = por %p93, %p94
      %s96 = ssub.s32 %s15, %s22
      %p97 = scmp.eq.s32.totalorder %s96, 0
      %s99 = sadd.s32 %s98, 1
      %s100 = scalar_select %p97, %s98, %s99
      %p103 = pneg %p97
      %p104 = scmp.eq.s32.totalorder %s15, 2
      %p105 = por %p103, %p104
      %p106 = scmp.ne.s32.totalorder %s98, %s101
      %p107 = scmp.eq.s32.totalorder %s15, 0
      %p108 = por %p106, %p107
      %p109 = scmp.ne.s32.totalorder %s98, %s101
      %p110 = scmp.eq.s32.totalorder %s20, 2
      %p111 = por %p109, %p110
      %p112 = scmp.ne.s32.totalorder %s101, %s102
      %p113 = scmp.eq.s32.totalorder %s20, 0
      %p114 = por %p112, %p113
      %p115 = scmp.ne.s32.totalorder %s101, %s102
      %p116 = scmp.eq.s32.totalorder %s21, 2
      %p117 = por %p115, %p116
      %p119 = scmp.ne.s32.totalorder %s102, %s118
      %p120 = scmp.eq.s32.totalorder %s21, 0
      %p121 = por %p119, %p120
      %s123 = sadd.s32 %s122, 1
      %p126 = scmp.eq.s32.totalorder %s15, 2
      %p127 = scmp.ne.s32.totalorder %s122, %s124
      %p128 = scmp.eq.s32.totalorder %s15, 0
      %p129 = por %p127, %p128
      %p130 = scmp.ne.s32.totalorder %s122, %s124
      %p131 = scmp.eq.s32.totalorder %s20, 2
      %p132 = por %p130, %p131
      %p133 = scmp.ne.s32.totalorder %s124, %s125
      %p134 = scmp.eq.s32.totalorder %s20, 0
      %p135 = por %p133, %p134
      %p136 = scmp.ne.s32.totalorder %s124, %s125
      %p137 = scmp.eq.s32.totalorder %s21, 2
      %p138 = por %p136, %p137
      %p140 = scmp.ne.s32.totalorder %s125, %s139
      %p141 = scmp.eq.s32.totalorder %s21, 0
      %p142 = por %p140, %p141
      %p143 = scmp.le.s32.totalorder 1, %s15
      %p144 = scmp.lt.s32.totalorder %s15, 4
      %p145 = pnand %p143, %p144
      %p146 = pneg %p145
      // Predicated region
      $region9: #{tpu_custom_call.1} parent=5 // pred_check
        _
      $region10: #{tpu_custom_call.1} parent=5 // pred_check_branch
        %148 = sbr.rel (%p145) target = $region12
      $region11: #{tpu_custom_call.1} parent=5 // pred_region
        %s149 = ssub.s32 %s15, 1
        // Predicated region
        $region13: #{tpu_custom_call.1} parent=11 // pred_check
          %p150 = pneg %p36
        $region14: #{tpu_custom_call.1} parent=11 // pred_check_branch
          %152 = sbr.rel (%p150) target = $region16
        $region15: #{tpu_custom_call.1} parent=11 // pred_region
          %s154 = ssub.s32 128, 128
          %155 = vsyncadd [#allocation4], %s154
          %s157 = sshll.u32 [#allocation3], 4
          %s158 = int_to_ptr.vmem [resolvable:$true] %s157
          %160 = dma.hbm_to_vmem [thread:$0]  %s0, 128, %s158, [#allocation4]
        $region16: #{tpu_custom_call.1} parent=11 // pred_fallthru
          _
      $region12: #{tpu_custom_call.1} parent=5 // pred_fallthru
        _
      %p161 = scmp.lt.s32.totalorder %s15, 3
      // Predicated region
      $region17: #{tpu_custom_call.1} parent=5 // pred_check
        %p162 = pneg %p161
      $region18: #{tpu_custom_call.1} parent=5 // pred_check_branch
        %164 = sbr.rel (%p162) target = $region20
      $region19: #{tpu_custom_call.1} parent=5 // pred_region
        // Predicated region
        $region21: #{tpu_custom_call.1} parent=19 // pred_check
          %p165 = pneg %p56
        $region22: #{tpu_custom_call.1} parent=19 // pred_check_branch
          %167 = sbr.rel (%p165) target = $region24
        $region23: #{tpu_custom_call.1} parent=19 // pred_region
          %s168 = sand.u32 %s46, 1
          %s169 = scalar_lea.sflag [#allocation7], %s168
          %s170 = sand.u32 %s46, 1
          %s171 = smul.addr %s170, 128
          %s172 = scalar_lea.vmem [#allocation6], %s171
          %s174 = ssub.s32 2048, 2048
          %175 = vsyncadd %s169, %s174
          %s176 = smul.addr %s15, 16
          %s177 = smul.addr %s176, 128
          %s178 = scalar_lea.hbm %s1, %s177
          %s179 = sshll.u32 %s172, 4
          %s180 = int_to_ptr.vmem [resolvable:$true] %s179
          %185 = dma.hbm_to_vmem [thread:$0]  %s178, 2048, %s180, %s169, 128, 128, 8
        $region24: #{tpu_custom_call.1} parent=19 // pred_fallthru
          _
        // Predicated region
        $region25: #{tpu_custom_call.1} parent=19 // pred_check
          %p186 = pneg %p82
        $region26: #{tpu_custom_call.1} parent=19 // pred_check_branch
          %188 = sbr.rel (%p186) target = $region28
        $region27: #{tpu_custom_call.1} parent=19 // pred_region
          %p189 = scmp.lt.s32.totalorder %s15, 2
          %s190 = scalar_select %p189, %s15, 2
          %s191 = scalar_lea.vmem %s2, %s190
        $region28: #{tpu_custom_call.1} parent=19 // pred_fallthru
          _
        // Predicated region
        $region29: #{tpu_custom_call.1} parent=19 // pred_check
          %p192 = pneg %p108
        $region30: #{tpu_custom_call.1} parent=19 // pred_check_branch
          %194 = sbr.rel (%p192) target = $region32
        $region31: #{tpu_custom_call.1} parent=19 // pred_region
          %p195 = scmp.lt.s32.totalorder %s15, 2
          %s196 = scalar_select %p195, %s15, 2
          %s197 = scalar_lea.vmem %s3, %s196
        $region32: #{tpu_custom_call.1} parent=19 // pred_fallthru
          _
      $region20: #{tpu_custom_call.1} parent=5 // pred_fallthru
        _
      %p198 = scmp.le.s32.totalorder 1, %s15
      %p199 = scmp.lt.s32.totalorder %s15, 4
      %p200 = pnand %p198, %p199
      %p201 = pneg %p200
      // Predicated region
      $region33: #{tpu_custom_call.1} parent=5 // pred_check
        _
      $region34: #{tpu_custom_call.1} parent=5 // pred_check_branch
        %203 = sbr.rel (%p200) target = $region36
      $region35: #{tpu_custom_call.1} parent=5 // pred_region
        %s204 = ssub.s32 %s15, 1
        // Predicated region
        $region37: #{tpu_custom_call.1} parent=35 // pred_check
          %p205 = pneg %p36
        $region38: #{tpu_custom_call.1} parent=35 // pred_check_branch
          %207 = sbr.rel (%p205) target = $region40
        $region39: #{tpu_custom_call.1} parent=35 // pred_region
          %208 = dma.done [#allocation4], 128
        $region40: #{tpu_custom_call.1} parent=35 // pred_fallthru
          _
        %s209 = sand.u32 %s49, 1
        %s210 = scalar_lea.sflag [#allocation7], %s209
        %s211 = sand.u32 %s49, 1
        %s212 = smul.addr %s211, 128
        %s213 = scalar_lea.vmem [#allocation6], %s212
        // Predicated region
        $region41: #{tpu_custom_call.1} parent=35 // pred_check
          %p214 = pneg %p62
        $region42: #{tpu_custom_call.1} parent=35 // pred_check_branch
          %216 = sbr.rel (%p214) target = $region44
        $region43: #{tpu_custom_call.1} parent=35 // pred_region
          %217 = dma.done %s210, 2048
        $region44: #{tpu_custom_call.1} parent=35 // pred_fallthru
          _
        %p218 = pneg %p36
        %p219 = pneg %p33
        %s220 = sand.u32 %s49, 1
        %s221 = scalar_lea.sflag [#allocation7], %s220
        %s222 = sand.u32 %s49, 1
        %s223 = smul.addr %s222, 128
        %s224 = scalar_lea.vmem [#allocation6], %s223
        %p225 = pneg %p62
        %p226 = pneg %p59
        %p227 = scmp.lt.s32.totalorder %s20, 2
        %s228 = scalar_select %p227, %s20, 2
        %s229 = scalar_lea.vmem %s2, %s228
        %p230 = pneg %p88
        %p231 = pneg %p85
        %p232 = scmp.lt.s32.totalorder %s20, 2
        %s233 = scalar_select %p232, %s20, 2
        %s234 = scalar_lea.vmem %s3, %s233
        %p235 = pneg %p114
        %p236 = pneg %p111
        %p237 = pneg %p135
        %p238 = pneg %p132
        %p239 = scmp.lt.s32.totalorder %s20, 2
        %s240 = scalar_select %p239, %s20, 2
        %s241 = scalar_lea.vmem %s2, %s240
        %p242 = scmp.lt.s32.totalorder %s20, 2
        %s243 = scalar_select %p242, %s20, 2
        %s244 = scalar_lea.vmem %s3, %s243
        %p245 = scmp.eq.s32.totalorder %s20, 0
        // Predicated region
        $region45: #{tpu_custom_call.1} parent=35 // pred_check
          %p246 = pneg %p245
        $region46: #{tpu_custom_call.1} parent=35 // pred_check_branch
          %248 = sbr.rel (%p246) target = $region48
        $region47: #{tpu_custom_call.1} parent=35 // pred_region
          %v249 = vld [vmem:[#allocation3] sm:$0xff]
          %250 = vst [vmem:[#allocation2] sm:$0xff] %v249
        $region48: #{tpu_custom_call.1} parent=35 // pred_fallthru
          _
        %v251 = vld [vmem:[#allocation2] sm:$0xff]
        %v252 = vld [vmem:[%s213] sm:$0xff]
        %v253 = vld [vmem:[%s213 + $0x8] sm:$0xff]
        %v254 = vld [vmem:[%s213 + $0x10] sm:$0xff]
        %v255 = vld [vmem:[%s213 + $0x18] sm:$0xff]
        %v256 = vld [vmem:[%s213 + $0x20] sm:$0xff]
        %v257 = vld [vmem:[%s213 + $0x28] sm:$0xff]
        %v258 = vld [vmem:[%s213 + $0x30] sm:$0xff]
        %v259 = vld [vmem:[%s213 + $0x38] sm:$0xff]
        %v260 = vld [vmem:[%s213 + $0x40] sm:$0xff]
        %v261 = vld [vmem:[%s213 + $0x48] sm:$0xff]
        %v262 = vld [vmem:[%s213 + $0x50] sm:$0xff]
        %v263 = vld [vmem:[%s213 + $0x58] sm:$0xff]
        %v264 = vld [vmem:[%s213 + $0x60] sm:$0xff]
        %v265 = vld [vmem:[%s213 + $0x68] sm:$0xff]
        %v266 = vld [vmem:[%s213 + $0x70] sm:$0xff]
        %v267 = vld [vmem:[%s213 + $0x78] sm:$0xff]
        %268 = vmatprep.subr.mxu0 0.0
        %269 = vmatpush1.msra.mxu0 %v252
        %270 = vmatprep.subr.mxu0 0.0
        %271 = vmatpush1.msra.mxu0 %v253
        %272 = vmatprep.subr.mxu0 0.0
        %273 = vmatpush1.msra.mxu0 %v254
        %274 = vmatprep.subr.mxu0 0.0
        %275 = vmatpush1.msra.mxu0 %v255
        %276 = vmatprep.subr.mxu0 0.0
        %277 = vmatpush1.msra.mxu0 %v256
        %278 = vmatprep.subr.mxu0 0.0
        %279 = vmatpush1.msra.mxu0 %v257
        %280 = vmatprep.subr.mxu0 0.0
        %281 = vmatpush1.msra.mxu0 %v258
        %282 = vmatprep.subr.mxu0 0.0
        %283 = vmatpush1.msra.mxu0 %v259
        %284 = vmatprep.subr.mxu0 0.0
        %285 = vmatpush1.msra.mxu0 %v260
        %286 = vmatprep.subr.mxu0 0.0
        %287 = vmatpush1.msra.mxu0 %v261
        %288 = vmatprep.subr.mxu0 0.0
        %289 = vmatpush1.msra.mxu0 %v262
        %290 = vmatprep.subr.mxu0 0.0
        %291 = vmatpush1.msra.mxu0 %v263
        %292 = vmatprep.subr.mxu0 0.0
        %293 = vmatpush1.msra.mxu0 %v264
        %294 = vmatprep.subr.mxu0 0.0
        %295 = vmatpush1.msra.mxu0 %v265
        %296 = vmatprep.subr.mxu0 0.0
        %297 = vmatpush1.msra.mxu0 %v266
        %298 = vmatprep.subr.mxu0 0.0
        %299 = vmatpush1.msra.mxu0 %v267
        %300 = vmatprep.subr.mxu0 0.0
        %301 = vmatpush1.msra.mxu0 0.0
        %302 = vmatprep.subr.mxu0 0.0
        %303 = vmatpush1.msra.mxu0 0.0
        %304 = vmatprep.subr.mxu0 0.0
        %305 = vmatpush1.msra.mxu0 0.0
        %306 = vmatprep.subr.mxu0 0.0
        %307 = vmatpush1.msra.mxu0 0.0
        %308 = vmatprep.subr.mxu0 0.0
        %309 = vmatpush1.msra.mxu0 0.0
        %310 = vmatprep.subr.mxu0 0.0
        %311 = vmatpush1.msra.mxu0 0.0
        %312 = vmatprep.subr.mxu0 0.0
        %313 = vmatpush1.msra.mxu0 0.0
        %314 = vmatprep.subr.mxu0 0.0
        %315 = vmatpush1.msra.mxu0 0.0
        %316 = vmatprep.subr.mxu0 0.0
        %317 = vmatpush1.msra.mxu0 0.0
        %318 = vmatprep.subr.mxu0 0.0
        %319 = vmatpush1.msra.mxu0 0.0
        %320 = vmatprep.subr.mxu0 0.0
        %321 = vmatpush1.msra.mxu0 0.0
        %322 = vmatprep.subr.mxu0 0.0
        %323 = vmatpush1.msra.mxu0 0.0
        %324 = vmatprep.subr.mxu0 0.0
        %325 = vmatpush1.msra.mxu0 0.0
        %326 = vmatprep.subr.mxu0 0.0
        %327 = vmatpush1.msra.mxu0 0.0
        %328 = vmatprep.subr.mxu0 0.0
        %329 = vmatpush1.msra.mxu0 0.0
        %330 = vmatprep.subr.mxu0 0.0
        %331 = vmatpush1.msra.mxu0 0.0
        %332 = vmatprep.mubr.f32.mxu0 0.0
        %333 = vmatmul.mubr.f32.gmra.mrb[0].mxu0 %v251
        %v334 = vpop.f32.mrb[0].mxu0
        %v335 = vadd.f32 0.0, %v334
        %v336 = vpop.f32.mrb[0].mxu0
        %337 = vdwg.mxu0
        %p338 = scmp.lt.s32.totalorder %s20, 2
        // Predicated region
        $region49: #{tpu_custom_call.1} parent=35 // pred_check
          %p339 = pneg %p338
        $region50: #{tpu_custom_call.1} parent=35 // pred_check_branch
          %341 = sbr.rel (%p339) target = $region52
        $region51: #{tpu_custom_call.1} parent=35 // pred_region
          %v342 = vrot.slane %v335, 4
          %v343 = vadd.f32 %v335, %v342
          %v344 = vrot.slane %v343, 2
          %v345 = vadd.f32 %v343, %v344
          %v346 = vrot.slane %v345, 1
          %v347 = vadd.f32 %v345, %v346
          %v348 = vmul.f32 %v347, 0.125
          %v349 = vsub.f32 %v335, %v348
          %v350 = vmul.f32 %v349, %v349
          %v351 = vrot.slane %v350, 4
          %v352 = vadd.f32 %v350, %v351
          %v353 = vrot.slane %v352, 2
          %v354 = vadd.f32 %v352, %v353
          %v355 = vrot.slane %v354, 1
          %v356 = vadd.f32 %v354, %v355
          %v357 = vmul.f32 %v356, 0.125
          %v358 = vld [vmem:[%s241] sm:$0x1]
          %v359 = vadd.f32 %v357, 1e-05
          %v360 = vrsqrt.pop %v359
          %v361 = vmul.f32 %v358, %v360
          %v363 = vlaneseq
          %v364 = vshrl.u32 %v363, 7
          %v365 = vsub.s32 0, %v364
          %v366 = vrot.slane %v361, %v365
          %v368 = vmul.f32 %v349, %v366
          %v369 = vld [vmem:[%s244] sm:$0x1]
          %v371 = vlaneseq
          %v372 = vshrl.u32 %v371, 7
          %v373 = vsub.s32 0, %v372
          %v374 = vrot.slane %v369, %v373
          %v376 = vadd.f32 %v368, %v374
          %v377 = vmax.f32 %v376, 0.0
          %378 = vst [vmem:[#allocation2] sm:$0xff] %v377
        $region52: #{tpu_custom_call.1} parent=35 // pred_fallthru
          _
        %p379 = scmp.eq.s32.totalorder %s20, 2
        // Predicated region
        $region53: #{tpu_custom_call.1} parent=35 // pred_check
          %p380 = pneg %p379
        $region54: #{tpu_custom_call.1} parent=35 // pred_check_branch
          %382 = sbr.rel (%p380) target = $region56
        $region55: #{tpu_custom_call.1} parent=35 // pred_region
          %v383 = vld [vmem:[%s244] sm:$0x1]
          %v385 = vlaneseq
          %v386 = vshrl.u32 %v385, 7
          %v387 = vsub.s32 0, %v386
          %v388 = vrot.slane %v383, %v387
          %v390 = vadd.f32 %v335, %v388
          %391 = vst [vmem:[#allocation8] sm:$0xff] %v390
        $region56: #{tpu_custom_call.1} parent=35 // pred_fallthru
          _
        // Predicated region
        $region57: #{tpu_custom_call.1} parent=35 // pred_check
          %p392 = pneg %p132
        $region58: #{tpu_custom_call.1} parent=35 // pred_check_branch
          %394 = sbr.rel (%p392) target = $region60
        $region59: #{tpu_custom_call.1} parent=35 // pred_region
          %s396 = ssub.s32 128, 128
          %397 = vsyncadd [#allocation5], %s396
          %s399 = sshll.u32 [#allocation8], 4
          %s400 = int_to_ptr.vmem [resolvable:$true] %s399
          %402 = dma.vmem_to_hbm [thread:$0]  %s400, 128, %s4, [#allocation5]
        $region60: #{tpu_custom_call.1} parent=35 // pred_fallthru
          _
        // Predicated region
        $region61: #{tpu_custom_call.1} parent=35 // pred_check
          %p403 = pneg %p132
        $region62: #{tpu_custom_call.1} parent=35 // pred_check_branch
          %405 = sbr.rel (%p403) target = $region64
        $region63: #{tpu_custom_call.1} parent=35 // pred_region
          %406 = dma.done [#allocation5], 128
        $region64: #{tpu_custom_call.1} parent=35 // pred_fallthru
          _
      $region36: #{tpu_custom_call.1} parent=5 // pred_fallthru
        _
      %p407 = scmp.le.s32.totalorder 2, %s15
      // Predicated region
      $region65: #{tpu_custom_call.1} parent=5 // pred_check
        %p408 = pneg %p407
      $region66: #{tpu_custom_call.1} parent=5 // pred_check_branch
        %410 = sbr.rel (%p408) target = $region68
      $region67: #{tpu_custom_call.1} parent=5 // pred_region
        %s411 = ssub.s32 %s15, 2
      $region68: #{tpu_custom_call.1} parent=5 // pred_fallthru
        _
    $region6: #{tpu_custom_call.1} parent=1 // loop_footer
      %s19 = sadd.s32 1, %s15
    $region7: #{tpu_custom_call.1} parent=1 // loop_footer_branch
      %14 = sbr.rel target = $region3
    $region8: #{tpu_custom_call.1} parent=1 // loop_exit
      _
    %412 = vsyncpa [#allocation4], 1
    %s413 = scalar_lea.sflag [#allocation4], 1
    %414 = vsyncpa %s413, 1
    %415 = vsyncpa [#allocation7], 1
    %s416 = scalar_lea.sflag [#allocation7], 1
    %417 = vsyncpa %s416, 1
    %418 = vsyncpa [#allocation5], 1
    %s419 = scalar_lea.sflag [#allocation5], 1
    %420 = vsyncpa %s419, 1

</llo_original>
